<compile_context>
chip_gen: v5e
topology: v5e:2x2
jax: 0.10.0
libtpu: 0.0.40
codegen_flags: <defaults>
</compile_context>

<pallas_src>
import jax
import jax.numpy as jnp
from jax.experimental import pallas as pl
from jax.experimental.pallas import tpu as pltpu


def _round_up(x, m):
    return ((x + m - 1) // m) * m


def _lfm_kernel(feat_ref, w_ref, bias_ref, out_ref):
    # feat: (TM, D) f32, w: (1, D) f32, bias/out: (1, TM) f32
    prod = feat_ref[...] * w_ref[...]            # VPU elementwise, w broadcast over rows
    score = jnp.sum(prod, axis=-1)               # XLU cross-lane reduce -> (TM,)
    out_ref[...] = score[None, :] + bias_ref[...]  # lane-dense (1, TM) store


def lfm_forward(feature, user_id, item_id, fc_w, fc_b, b_users, b_items, *, tm=1024):
    """Pallas implementation of LFM.forward. Returns (B, 1) f32."""
    B, D = feature.shape
    feature = feature.astype(jnp.float32)

    # Fused bias stream: fc.bias + b_users[user_id] + b_items[item_id]  -> (B,)
    bias = (fc_b[0] + b_users[user_id, 0] + b_items[item_id, 0]).astype(jnp.float32)

    # Tile over the batch; TM multiple of 128 (lane-dense output tiles).
    tm = min(tm, _round_up(B, 128))
    b_pad = _round_up(B, tm)
    if b_pad != B:
        feature = jnp.pad(feature, ((0, b_pad - B), (0, 0)))
        bias = jnp.pad(bias, (0, b_pad - B))
    bias2d = bias.reshape(1, b_pad)

    out = pl.pallas_call(
        _lfm_kernel,
        out_shape=jax.ShapeDtypeStruct((1, b_pad), jnp.float32),
        grid_spec=pltpu.PrefetchScalarGridSpec(
            num_scalar_prefetch=0,
            grid=(b_pad // tm,),
            in_specs=[
                pl.BlockSpec((tm, D), lambda i: (i, 0)),   # feature tile
                pl.BlockSpec((1, D), lambda i: (0, 0)),    # fc weight (resident)
                pl.BlockSpec((1, tm), lambda i: (0, i)),   # fused bias tile
            ],
            out_specs=pl.BlockSpec((1, tm), lambda i: (0, i)),
        ),
        compiler_params=pltpu.CompilerParams(
            dimension_semantics=("parallel",),
            vmem_limit_bytes=32 * 1024 * 1024,
        ),
    )(feature, fc_w.astype(jnp.float32), bias2d)

    return out[0, :B].reshape(B, 1)


def init_lfm_params(key, dim, user_num, item_num):
    """Deterministic parameter init mirroring LFM.__init__ / init_weight."""
    k_w, k_b, k_bu, k_bi = jax.random.split(key, 4)
    fc_w = jax.random.uniform(k_w, (1, dim), jnp.float32, minval=-0.1, maxval=0.1)
    fc_b = jax.random.uniform(k_b, (1,), jnp.float32, minval=0.5, maxval=1.5)
    # note: original init_weight re-inits b_users twice and leaves b_items as randn
    b_users = jax.random.uniform(k_bu, (user_num, 1), jnp.float32, minval=0.5, maxval=1.5)
    b_items = jax.random.normal(k_bi, (item_num, 1), jnp.float32)
    return fc_w, fc_b, b_users, b_items


if __name__ == "__main__":
    key = jax.random.PRNGKey(0)
    dim, user_num, item_num, B = 32, 16, 16, 8

    k_params, k_feat, k_uid, k_iid = jax.random.split(key, 4)
    fc_w, fc_b, b_users, b_items = init_lfm_params(k_params, dim, user_num, item_num)

    feature = jax.random.normal(k_feat, (B, dim), jnp.float32)
    user_id = jax.random.randint(k_uid, (B,), 0, user_num)
    item_id = jax.random.randint(k_iid, (B,), 0, item_num)

    out = lfm_forward(feature, user_id, item_id, fc_w, fc_b, b_users, b_items)
    out = jax.block_until_ready(out)

    # Pure-JAX reference check.
    ref = feature @ fc_w.T + fc_b.reshape(1, 1) + b_users[user_id] + b_items[item_id]
    assert out.shape == (B, 1)
    assert jnp.allclose(out, ref, atol=1e-5, rtol=1e-5)

    print("KERNEL_OK")
</pallas_src>

<mosaic_0001>
module attributes {stable_mosaic.version = 11 : i64} {
  func.func @_lfm_kernel(%arg0: i32, %arg1: memref<128x32xf32, #tpu.memory_space<vmem>>, %arg2: memref<1x32xf32, #tpu.memory_space<vmem>>, %arg3: memref<1x128xf32, #tpu.memory_space<vmem>>, %arg4: memref<1x128xf32, #tpu.memory_space<vmem>>) attributes {dimension_semantics = [#tpu.dimension_semantics<parallel>], iteration_bounds = array<i64: 1>, scalar_prefetch = 0 : i64, scratch_operands = 0 : i64, tpu.core_type = #tpu.core_type<tc>, window_params = [{transform_indices = @transform_0, window_bounds = array<i64: 128, 32>}, {pipeline_mode = #tpu.pipeline_mode<synchronous>, transform_indices = @transform_1, window_bounds = array<i64: 1, 32>}, {transform_indices = @transform_2, window_bounds = array<i64: 1, 128>}, {transform_indices = @transform_3, window_bounds = array<i64: 1, 128>}]} {
    %c0 = arith.constant 0 : index
    %c0_0 = arith.constant 0 : index
    %0 = vector.load %arg1[%c0, %c0_0] : memref<128x32xf32, #tpu.memory_space<vmem>>, vector<128x32xf32>
    %c0_1 = arith.constant 0 : index
    %c0_2 = arith.constant 0 : index
    %1 = vector.load %arg2[%c0_1, %c0_2] : memref<1x32xf32, #tpu.memory_space<vmem>>, vector<1x32xf32>
    %2 = vector.broadcast %1 : vector<1x32xf32> to vector<128x32xf32>
    %3 = arith.mulf %0, %2 : vector<128x32xf32>
    %cst = arith.constant dense<0.000000e+00> : vector<128xf32>
    %4 = vector.multi_reduction <add>, %3, %cst [1] : vector<128x32xf32> to vector<128xf32>
    %5 = vector.shape_cast %4 : vector<128xf32> to vector<1x128xf32>
    %c0_3 = arith.constant 0 : index
    %c0_4 = arith.constant 0 : index
    %6 = vector.load %arg3[%c0_3, %c0_4] : memref<1x128xf32, #tpu.memory_space<vmem>>, vector<1x128xf32>
    %7 = arith.addf %5, %6 : vector<1x128xf32>
    %c0_5 = arith.constant 0 : index
    %c0_6 = arith.constant 0 : index
    %8 = vector.load %arg4[%c0_5, %c0_6] : memref<1x128xf32, #tpu.memory_space<vmem>>, vector<1x128xf32>
    tpu.vector_store %arg4[%c0_5, %c0_6], %7 {strides = array<i32>} : memref<1x128xf32, #tpu.memory_space<vmem>>, vector<1x128xf32>,
    return
  }
  func.func @transform_0(%arg0: i32) -> (i32, i32) {
    %c0_i32 = arith.constant 0 : i32
    %c0_i32_0 = arith.constant 0 : i32
    return %arg0, %c0_i32 : i32, i32
  }
  func.func @transform_1(%arg0: i32) -> (i32, i32) {
    %c0_i32 = arith.constant 0 : i32
    %c0_i32_0 = arith.constant 0 : i32
    %c0_i32_1 = arith.constant 0 : i32
    return %c0_i32, %c0_i32_0 : i32, i32
  }
  func.func @transform_2(%arg0: i32) -> (i32, i32) {
    %c0_i32 = arith.constant 0 : i32
    %c0_i32_0 = arith.constant 0 : i32
    return %c0_i32, %arg0 : i32, i32
  }
  func.func @transform_3(%arg0: i32) -> (i32, i32) {
    %c0_i32 = arith.constant 0 : i32
    %c0_i32_0 = arith.constant 0 : i32
    return %c0_i32, %arg0 : i32, i32
  }
}

</mosaic_0001>

<llo_original>
// kernel: tpu_custom_call.1
$region0: #{tpu_custom_call.1}
  #allocation0 [shape = 'u32[]', space=smem, size = 0x4, offset = 0x4, fixed_abs, tag = 'smem constant byte address 0x4 - core index']
  #allocation1 [shape = 'u32[72,128]{1,0:T(1,128)}', space=vmem, size = 0x9000, scoped, tag = 'internal scratch']
  %s0 = inlined_call_operand.vmem [shape: f32[128,32], index: 0, kind: input, shape index: {}]
  %s1 = inlined_call_operand.vmem [shape: f32[1,32], index: 1, kind: input, shape index: {}]
  %s2 = inlined_call_operand.vmem [shape: f32[1,128], index: 2, kind: input, shape index: {}]
  %s3 = inlined_call_operand.hbm [shape: f32[1,128], index: 3, kind: output, shape index: {}]
  %s4 = sld [smem:[#allocation0]]
  $region22: #{tpu_custom_call.1} parent=0
    _
  %s6 = ssub.s32 1, %s4
  %s7 = scalar_select 0, %s6, %s4
  $region1: #{tpu_custom_call.1} parent=0
    #allocation2 [shape = 'u8[512]{0}', space=vmem, size = 0x400, scoped, tag = 'output window, operand 0, single buffered']
    #allocation3 [shape = 's32[1]{0}', space=sflag, size = 0x4, scoped, tag = 'scoped memory for tpu_custom_call.1']
    %8 = vsyncpa [#allocation3], 0
    // Predicated region
    $region2: #{tpu_custom_call.1} parent=1 // pred_check
      _
    $region3: #{tpu_custom_call.1} parent=1 // pred_check_branch
      %10 = sbr.rel (0) target = $region5
    $region4: #{tpu_custom_call.1} parent=1 // pred_region
      _
    $region5: #{tpu_custom_call.1} parent=1 // pred_fallthru
      _
    // Predicated region
    $region6: #{tpu_custom_call.1} parent=1 // pred_check
      _
    $region7: #{tpu_custom_call.1} parent=1 // pred_check_branch
      %12 = sbr.rel (0) target = $region9
    $region8: #{tpu_custom_call.1} parent=1 // pred_region
      _
    $region9: #{tpu_custom_call.1} parent=1 // pred_fallthru
      _
    // Predicated region
    $region10: #{tpu_custom_call.1} parent=1 // pred_check
      _
    $region11: #{tpu_custom_call.1} parent=1 // pred_check_branch
      %14 = sbr.rel (0) target = $region13
    $region12: #{tpu_custom_call.1} parent=1 // pred_region
      _
    $region13: #{tpu_custom_call.1} parent=1 // pred_fallthru
      _
    %v15 = vld [vmem:[%s0] sm:$0xff]
    %v16 = vld [vmem:[%s0 + $0x8] sm:$0xff]
    %v17 = vld [vmem:[%s0 + $0x10] sm:$0xff]
    %v18 = vld [vmem:[%s0 + $0x18] sm:$0xff]
    %v19 = vld [vmem:[%s0 + $0x20] sm:$0xff]
    %v20 = vld [vmem:[%s0 + $0x28] sm:$0xff]
    %v21 = vld [vmem:[%s0 + $0x30] sm:$0xff]
    %v22 = vld [vmem:[%s0 + $0x38] sm:$0xff]
    %v23 = vld [vmem:[%s0 + $0x40] sm:$0xff]
    %v24 = vld [vmem:[%s0 + $0x48] sm:$0xff]
    %v25 = vld [vmem:[%s0 + $0x50] sm:$0xff]
    %v26 = vld [vmem:[%s0 + $0x58] sm:$0xff]
    %v27 = vld [vmem:[%s0 + $0x60] sm:$0xff]
    %v28 = vld [vmem:[%s0 + $0x68] sm:$0xff]
    %v29 = vld [vmem:[%s0 + $0x70] sm:$0xff]
    %v30 = vld [vmem:[%s0 + $0x78] sm:$0xff]
    %v31 = vld [vmem:[%s1] sm:$0x1]
    %v33 = vperm.slane %v31, 0
    %v35 = vmul.f32 %v15, %v33
    %v36 = vmul.f32 %v16, %v33
    %v37 = vmul.f32 %v17, %v33
    %v38 = vmul.f32 %v18, %v33
    %v39 = vmul.f32 %v19, %v33
    %v40 = vmul.f32 %v20, %v33
    %v41 = vmul.f32 %v21, %v33
    %v42 = vmul.f32 %v22, %v33
    %v43 = vmul.f32 %v23, %v33
    %v44 = vmul.f32 %v24, %v33
    %v45 = vmul.f32 %v25, %v33
    %v46 = vmul.f32 %v26, %v33
    %v47 = vmul.f32 %v27, %v33
    %v48 = vmul.f32 %v28, %v33
    %v49 = vmul.f32 %v29, %v33
    %v50 = vmul.f32 %v30, %v33
    %vm51 = vcmask 261120
    %v52 = vsel %vm51, %v35, 0.0
    %53 = vadd.xlane.f32.xlu0 %v52
    %v54 = vpop.xlane.xlu0 %53
    %v55 = vsel %vm51, %v36, 0.0
    %56 = vadd.xlane.f32.xlu0 %v55
    %v57 = vpop.xlane.xlu0 %56
    %v58 = vsel %vm51, %v37, 0.0
    %59 = vadd.xlane.f32.xlu0 %v58
    %v60 = vpop.xlane.xlu0 %59
    %v61 = vsel %vm51, %v38, 0.0
    %62 = vadd.xlane.f32.xlu0 %v61
    %v63 = vpop.xlane.xlu0 %62
    %v64 = vsel %vm51, %v39, 0.0
    %65 = vadd.xlane.f32.xlu0 %v64
    %v66 = vpop.xlane.xlu0 %65
    %v67 = vsel %vm51, %v40, 0.0
    %68 = vadd.xlane.f32.xlu0 %v67
    %v69 = vpop.xlane.xlu0 %68
    %v70 = vsel %vm51, %v41, 0.0
    %71 = vadd.xlane.f32.xlu0 %v70
    %v72 = vpop.xlane.xlu0 %71
    %v73 = vsel %vm51, %v42, 0.0
    %74 = vadd.xlane.f32.xlu0 %v73
    %v75 = vpop.xlane.xlu0 %74
    %v76 = vsel %vm51, %v43, 0.0
    %77 = vadd.xlane.f32.xlu0 %v76
    %v78 = vpop.xlane.xlu0 %77
    %v79 = vsel %vm51, %v44, 0.0
    %80 = vadd.xlane.f32.xlu0 %v79
    %v81 = vpop.xlane.xlu0 %80
    %v82 = vsel %vm51, %v45, 0.0
    %83 = vadd.xlane.f32.xlu0 %v82
    %v84 = vpop.xlane.xlu0 %83
    %v85 = vsel %vm51, %v46, 0.0
    %86 = vadd.xlane.f32.xlu0 %v85
    %v87 = vpop.xlane.xlu0 %86
    %v88 = vsel %vm51, %v47, 0.0
    %89 = vadd.xlane.f32.xlu0 %v88
    %v90 = vpop.xlane.xlu0 %89
    %v91 = vsel %vm51, %v48, 0.0
    %92 = vadd.xlane.f32.xlu0 %v91
    %v93 = vpop.xlane.xlu0 %92
    %v94 = vsel %vm51, %v49, 0.0
    %95 = vadd.xlane.f32.xlu0 %v94
    %v96 = vpop.xlane.xlu0 %95
    %v97 = vsel %vm51, %v50, 0.0
    %98 = vadd.xlane.f32.xlu0 %v97
    %v99 = vpop.xlane.xlu0 %98
    %v100 = vld [vmem:[%s2] sm:$0x1]
    %v102 = vperm.slane %v100, 0
    %v103 = vlaneseq
    %v104 = vshrl.u32 %v103, 7
    %106 = vset.pattern.permute.xlu0 %v104
    %107 = vperm.xlu0 %106, %v102
    %v108 = vpop.permute.xlu0 %107
    %v109 = vlaneseq
    %v110 = vshrl.u32 %v109, 7
    %v111 = vadd.s32 %v110, 8
    %112 = vset.pattern.permute.xlu0 %v111
    %113 = vperm.xlu0 %112, %v102
    %v114 = vpop.permute.xlu0 %113
    %v115 = vlaneseq
    %v116 = vshrl.u32 %v115, 7
    %v117 = vadd.s32 %v116, 16
    %118 = vset.pattern.permute.xlu0 %v117
    %119 = vperm.xlu0 %118, %v102
    %v120 = vpop.permute.xlu0 %119
    %v121 = vlaneseq
    %v122 = vshrl.u32 %v121, 7
    %v123 = vadd.s32 %v122, 24
    %124 = vset.pattern.permute.xlu0 %v123
    %125 = vperm.xlu0 %124, %v102
    %v126 = vpop.permute.xlu0 %125
    %v127 = vlaneseq
    %v128 = vshrl.u32 %v127, 7
    %v129 = vadd.s32 %v128, 32
    %130 = vset.pattern.permute.xlu0 %v129
    %131 = vperm.xlu0 %130, %v102
    %v132 = vpop.permute.xlu0 %131
    %v133 = vlaneseq
    %v134 = vshrl.u32 %v133, 7
    %v135 = vadd.s32 %v134, 40
    %136 = vset.pattern.permute.xlu0 %v135
    %137 = vperm.xlu0 %136, %v102
    %v138 = vpop.permute.xlu0 %137
    %v139 = vlaneseq
    %v140 = vshrl.u32 %v139, 7
    %v141 = vadd.s32 %v140, 48
    %142 = vset.pattern.permute.xlu0 %v141
    %143 = vperm.xlu0 %142, %v102
    %v144 = vpop.permute.xlu0 %143
    %v145 = vlaneseq
    %v146 = vshrl.u32 %v145, 7
    %v147 = vadd.s32 %v146, 56
    %148 = vset.pattern.permute.xlu0 %v147
    %149 = vperm.xlu0 %148, %v102
    %v150 = vpop.permute.xlu0 %149
    %v151 = vlaneseq
    %v152 = vshrl.u32 %v151, 7
    %v153 = vadd.s32 %v152, 64
    %154 = vset.pattern.permute.xlu0 %v153
    %155 = vperm.xlu0 %154, %v102
    %v156 = vpop.permute.xlu0 %155
    %v157 = vlaneseq
    %v158 = vshrl.u32 %v157, 7
    %v159 = vadd.s32 %v158, 72
    %160 = vset.pattern.permute.xlu0 %v159
    %161 = vperm.xlu0 %160, %v102
    %v162 = vpop.permute.xlu0 %161
    %v163 = vlaneseq
    %v164 = vshrl.u32 %v163, 7
    %v165 = vadd.s32 %v164, 80
    %166 = vset.pattern.permute.xlu0 %v165
    %167 = vperm.xlu0 %166, %v102
    %v168 = vpop.permute.xlu0 %167
    %v169 = vlaneseq
    %v170 = vshrl.u32 %v169, 7
    %v171 = vadd.s32 %v170, 88
    %172 = vset.pattern.permute.xlu0 %v171
    %173 = vperm.xlu0 %172, %v102
    %v174 = vpop.permute.xlu0 %173
    %v175 = vlaneseq
    %v176 = vshrl.u32 %v175, 7
    %v177 = vadd.s32 %v176, 96
    %178 = vset.pattern.permute.xlu0 %v177
    %179 = vperm.xlu0 %178, %v102
    %v180 = vpop.permute.xlu0 %179
    %v181 = vlaneseq
    %v182 = vshrl.u32 %v181, 7
    %v183 = vadd.s32 %v182, 104
    %184 = vset.pattern.permute.xlu0 %v183
    %185 = vperm.xlu0 %184, %v102
    %v186 = vpop.permute.xlu0 %185
    %v187 = vlaneseq
    %v188 = vshrl.u32 %v187, 7
    %v189 = vadd.s32 %v188, 112
    %190 = vset.pattern.permute.xlu0 %v189
    %191 = vperm.xlu0 %190, %v102
    %v192 = vpop.permute.xlu0 %191
    %v193 = vlaneseq
    %v194 = vshrl.u32 %v193, 7
    %v195 = vadd.s32 %v194, 120
    %196 = vset.pattern.permute.xlu0 %v195
    %197 = vperm.xlu0 %196, %v102
    %v198 = vpop.permute.xlu0 %197
    %v215 = vadd.f32 %v54, %v108
    %v216 = vadd.f32 %v57, %v114
    %v217 = vadd.f32 %v60, %v120
    %v218 = vadd.f32 %v63, %v126
    %v219 = vadd.f32 %v66, %v132
    %v220 = vadd.f32 %v69, %v138
    %v221 = vadd.f32 %v72, %v144
    %v222 = vadd.f32 %v75, %v150
    %v223 = vadd.f32 %v78, %v156
    %v224 = vadd.f32 %v81, %v162
    %v225 = vadd.f32 %v84, %v168
    %v226 = vadd.f32 %v87, %v174
    %v227 = vadd.f32 %v90, %v180
    %v228 = vadd.f32 %v93, %v186
    %v229 = vadd.f32 %v96, %v192
    %v230 = vadd.f32 %v99, %v198
    %247 = vset.pattern.permute.xlu0 0
    %248 = vperm.xlu0 %247, %v215
    %v249 = vpop.permute.xlu0 %248
    %250 = vset.pattern.permute.xlu0 0
    %251 = vperm.xlu0 %250, %v216
    %v252 = vpop.permute.xlu0 %251
    %253 = vset.pattern.permute.xlu0 0
    %254 = vperm.xlu0 %253, %v217
    %v255 = vpop.permute.xlu0 %254
    %256 = vset.pattern.permute.xlu0 0
    %257 = vperm.xlu0 %256, %v218
    %v258 = vpop.permute.xlu0 %257
    %259 = vset.pattern.permute.xlu0 0
    %260 = vperm.xlu0 %259, %v219
    %v261 = vpop.permute.xlu0 %260
    %262 = vset.pattern.permute.xlu0 0
    %263 = vperm.xlu0 %262, %v220
    %v264 = vpop.permute.xlu0 %263
    %265 = vset.pattern.permute.xlu0 0
    %266 = vperm.xlu0 %265, %v221
    %v267 = vpop.permute.xlu0 %266
    %268 = vset.pattern.permute.xlu0 0
    %269 = vperm.xlu0 %268, %v222
    %v270 = vpop.permute.xlu0 %269
    %271 = vset.pattern.permute.xlu0 0
    %272 = vperm.xlu0 %271, %v223
    %v273 = vpop.permute.xlu0 %272
    %274 = vset.pattern.permute.xlu0 0
    %275 = vperm.xlu0 %274, %v224
    %v276 = vpop.permute.xlu0 %275
    %277 = vset.pattern.permute.xlu0 0
    %278 = vperm.xlu0 %277, %v225
    %v279 = vpop.permute.xlu0 %278
    %280 = vset.pattern.permute.xlu0 0
    %281 = vperm.xlu0 %280, %v226
    %v282 = vpop.permute.xlu0 %281
    %283 = vset.pattern.permute.xlu0 0
    %284 = vperm.xlu0 %283, %v227
    %v285 = vpop.permute.xlu0 %284
    %286 = vset.pattern.permute.xlu0 0
    %287 = vperm.xlu0 %286, %v228
    %v288 = vpop.permute.xlu0 %287
    %289 = vset.pattern.permute.xlu0 0
    %290 = vperm.xlu0 %289, %v229
    %v291 = vpop.permute.xlu0 %290
    %292 = vset.pattern.permute.xlu0 0
    %293 = vperm.xlu0 %292, %v230
    %v294 = vpop.permute.xlu0 %293
    %v295 = vlaneseq
    %v296 = vand.u32 %v295, 127
    %v297 = vperm.slane %v249, %v296
    %v298 = vadd.s32 %v296, 4294967288
    %v299 = vperm.slane %v252, %v298
    %vm300 = vcmask 130112
    %v301 = vsel %vm300, %v299, %v297
    %v302 = vadd.s32 %v296, 4294967280
    %v303 = vperm.slane %v255, %v302
    %vm304 = vcmask 195712
    %v305 = vsel %vm304, %v303, %v301
    %v306 = vadd.s32 %v296, 4294967272
    %v307 = vperm.slane %v258, %v306
    %vm308 = vcmask 261312
    %v309 = vsel %vm308, %v307, %v305
    %v310 = vadd.s32 %v296, 4294967264
    %v311 = vperm.slane %v261, %v310
    %vm312 = vcmask 326912
    %v313 = vsel %vm312, %v311, %v309
    %v314 = vadd.s32 %v296, 4294967256
    %v315 = vperm.slane %v264, %v314
    %vm316 = vcmask 392512
    %v317 = vsel %vm316, %v315, %v313
    %v318 = vadd.s32 %v296, 4294967248
    %v319 = vperm.slane %v267, %v318
    %vm320 = vcmask 458112
    %v321 = vsel %vm320, %v319, %v317
    %v322 = vadd.s32 %v296, 4294967240
    %v323 = vperm.slane %v270, %v322
    %vm324 = vcmask 523712
    %v325 = vsel %vm324, %v323, %v321
    %v326 = vadd.s32 %v296, 4294967232
    %v327 = vperm.slane %v273, %v326
    %vm328 = vcmask 589312
    %v329 = vsel %vm328, %v327, %v325
    %v330 = vadd.s32 %v296, 4294967224
    %v331 = vperm.slane %v276, %v330
    %vm332 = vcmask 654912
    %v333 = vsel %vm332, %v331, %v329
    %v334 = vadd.s32 %v296, 4294967216
    %v335 = vperm.slane %v279, %v334
    %vm336 = vcmask 720512
    %v337 = vsel %vm336, %v335, %v333
    %v338 = vadd.s32 %v296, 4294967208
    %v339 = vperm.slane %v282, %v338
    %vm340 = vcmask 786112
    %v341 = vsel %vm340, %v339, %v337
    %v342 = vadd.s32 %v296, 4294967200
    %v343 = vperm.slane %v285, %v342
    %vm344 = vcmask 851712
    %v345 = vsel %vm344, %v343, %v341
    %v346 = vadd.s32 %v296, 4294967192
    %v347 = vperm.slane %v288, %v346
    %vm348 = vcmask 917312
    %v349 = vsel %vm348, %v347, %v345
    %v350 = vadd.s32 %v296, 4294967184
    %v351 = vperm.slane %v291, %v350
    %vm352 = vcmask 982912
    %v353 = vsel %vm352, %v351, %v349
    %v354 = vadd.s32 %v296, 4294967176
    %v355 = vperm.slane %v294, %v354
    %vm356 = vcmask 1048512
    %v357 = vsel %vm356, %v355, %v353
    %359 = vst [vmem:[#allocation2] sm:$0x1] %v357
    // Predicated region
    $region14: #{tpu_custom_call.1} parent=1 // pred_check
      _
    $region15: #{tpu_custom_call.1} parent=1 // pred_check_branch
      %361 = sbr.rel (0) target = $region17
    $region16: #{tpu_custom_call.1} parent=1 // pred_region
      %363 = vsyncadd [#allocation3], 0
      %s365 = sshll.u32 [#allocation2], 4
      %s366 = int_to_ptr.vmem [resolvable:$true] %s365
      %s367 = sshll.u32 %s3, 4
      %s368 = int_to_ptr.hbm [resolvable:$true] %s367
      %370 = dma.vmem_to_hbm [thread:$0]  %s366, 16, %s368, [#allocation3]
    $region17: #{tpu_custom_call.1} parent=1 // pred_fallthru
      _
    // Predicated region
    $region18: #{tpu_custom_call.1} parent=1 // pred_check
      _
    $region19: #{tpu_custom_call.1} parent=1 // pred_check_branch
      %372 = sbr.rel (0) target = $region21
    $region20: #{tpu_custom_call.1} parent=1 // pred_region
      %374 = dma.done [#allocation3], 16
    $region21: #{tpu_custom_call.1} parent=1 // pred_fallthru
      _
    %375 = vsyncpa [#allocation3], 1

</llo_original>
